<compile_context>
chip_gen: v6e
topology: v6e:2x2x1
jax: 0.10.0
libtpu: 0.0.40
codegen_flags: <defaults>
</compile_context>

<pallas_src>
import functools

import jax
import jax.numpy as jnp
from jax.experimental import pallas as pl
from jax.experimental.pallas import tpu as pltpu


_LANE = 128
_TARGET_BLOCK_BYTES = 4 * 1024 * 1024   # ~2-4 MiB input blocks reach ~85%+ of HBM roofline
_MIN_GRID_STEPS = 4                     # keep >=4 grid steps so v7x's 2 TCs both get work


def _cdiv(a, b):
    return (a + b - 1) // b


def _sublanes(itemsize):
    # sublane packing: f32 -> 8, bf16 -> 16, int8/fp8 -> 32
    return max(8, 32 // itemsize)


def _vmem_capacity_bytes():
    try:
        return int(pltpu.get_tpu_info().vmem_capacity_bytes)
    except Exception:
        return 64 * 1024 * 1024   # conservative fallback (v7x per-TensorCore VMEM)


def _choose_tile_rows(rows, width, itemsize, n_f32_temps):
    """Pick a row tile from a per-generation VMEM budget + a bytes-based block target."""
    sub = _sublanes(itemsize)
    cap = _vmem_capacity_bytes()
    budget = (cap * 45) // 100                               # ~45% of VMEM for blocks+temps
    per_row = width * (4 * itemsize + 4 * n_f32_temps)       # 2x(in+out) blocks + f32 temps
    tile = max(sub, (budget // per_row) // sub * sub)
    # F-independent bytes target for the input block (replaces the old 1024-row cap).
    target = max(sub, (_TARGET_BLOCK_BYTES // (width * itemsize)) // sub * sub)
    tile = min(tile, target)
    # Keep at least ~_MIN_GRID_STEPS steps on the parallel axis (megacore on v7x).
    cap_steps = max(sub, _cdiv(_cdiv(rows, _MIN_GRID_STEPS), sub) * sub)
    tile = min(tile, cap_steps)
    rows_rounded = _cdiv(rows, sub) * sub
    tile = min(tile, rows_rounded)
    tile = max(sub, (tile // sub) * sub)
    footprint = tile * per_row + (2 << 20)
    vmem_limit = int(min(cap * 3 // 4, max(32 << 20, footprint + (16 << 20))))
    return tile, vmem_limit


def _ln_rowwise_kernel(x_ref, a_ref, b_ref, o_ref, *, eps, feat):
    """General path: one normalization group per row, features on the lane axis."""
    x = x_ref[...].astype(jnp.float32)                       # (T, F) f32 accumulation
    s1 = jnp.sum(x, axis=-1, keepdims=True)                  # (T, 1)
    s2 = jnp.sum(x * x, axis=-1, keepdims=True)              # (T, 1), independent of s1
    mean = s1 * (1.0 / feat)
    # Single-pass unbiased variance (torch.std default ddof=1).  The clamp guards the
    # E[x^2]-E[x]^2 cancellation when |mean| >> std (review caveat); f32 accumulation kept.
    var = jnp.maximum((s2 - s1 * mean) * (1.0 / (feat - 1)), 0.0)
    inv = pl.reciprocal(jnp.sqrt(var) + eps, approx=False)   # eps added to std, as in the module
    a = a_ref[...].astype(jnp.float32)                       # (1, F)
    b = b_ref[...].astype(jnp.float32)                       # (1, F)
    o_ref[...] = ((x - mean) * inv * a + b).astype(o_ref.dtype)


def _ln_packed_kernel(x_ref, a_ref, b_ref, o_ref, *, eps, feat):
    """Lane-dense path for small F: k = 128 // F rows packed into the 128-lane axis.

    Segmented (per-group) sums are computed on the otherwise-idle MXU with a
    block-diagonal 0/1 matrix, keeping VPU/XLU traffic low and stores unmasked.
    """
    x = x_ref[...].astype(jnp.float32)                       # (T, 128)
    p = x.shape[-1]
    hi_mask = p - feat                                       # feat is a power of two dividing p
    gi = jax.lax.broadcasted_iota(jnp.int32, (p, p), 0) & hi_mask
    gj = jax.lax.broadcasted_iota(jnp.int32, (p, p), 1) & hi_mask
    seg = (gi == gj).astype(jnp.float32)                     # (128, 128) block-diagonal ones
    s1 = jnp.dot(x, seg, preferred_element_type=jnp.float32)       # broadcasted group sums
    s2 = jnp.dot(x * x, seg, preferred_element_type=jnp.float32)
    mean = s1 * (1.0 / feat)
    var = jnp.maximum((s2 - s1 * mean) * (1.0 / (feat - 1)), 0.0)
    inv = pl.reciprocal(jnp.sqrt(var) + eps, approx=False)
    a = a_ref[...].astype(jnp.float32)                       # (1, 128): gamma tiled k times
    b = b_ref[...].astype(jnp.float32)
    o_ref[...] = ((x - mean) * inv * a + b).astype(o_ref.dtype)


def _ln_call(kernel, x2, a2, b2, tile_rows, vmem_limit):
    rows, width = x2.shape
    grid = (pl.cdiv(rows, tile_rows),)                       # ragged tail handled by masked stores
    return pl.pallas_call(
        kernel,
        out_shape=jax.ShapeDtypeStruct((rows, width), x2.dtype),
        grid_spec=pltpu.PrefetchScalarGridSpec(
            num_scalar_prefetch=0,
            grid=grid,
            in_specs=[
                pl.BlockSpec((tile_rows, width), lambda i: (i, 0)),
                pl.BlockSpec((1, width), lambda i: (0, 0)),
                pl.BlockSpec((1, width), lambda i: (0, 0)),
            ],
            out_specs=pl.BlockSpec((tile_rows, width), lambda i: (i, 0)),
        ),
        compiler_params=pltpu.CompilerParams(
            dimension_semantics=("parallel",),               # shards rows across v7x's 2 TCs
            vmem_limit_bytes=vmem_limit,
        ),
    )(x2, a2, b2)


def layer_norm(x, a_2, b_2, eps=1e-6):
    """x: (..., F) float array; a_2, b_2: (F,) params. Returns same shape/dtype as x."""
    orig_shape = x.shape
    feat = orig_shape[-1]
    assert feat > 1, "LayerNorm with unbiased std (ddof=1) requires features > 1"
    rows = 1
    for d in orig_shape[:-1]:
        rows *= d
    itemsize = jnp.dtype(x.dtype).itemsize

    x2 = x.reshape(rows, feat)
    a2 = a_2.reshape(1, feat)
    b2 = b_2.reshape(1, feat)

    pack = _LANE // feat if (feat < _LANE and _LANE % feat == 0) else 1
    if pack > 1 and rows % pack == 0:
        # Free row-major reshape: (rows, F) -> (rows//k, k*F = 128) -> lane-dense blocks.
        xp = x2.reshape(rows // pack, pack * feat)
        ap = jnp.tile(a2, (1, pack))
        bp = jnp.tile(b2, (1, pack))
        tile_rows, vmem_limit = _choose_tile_rows(rows // pack, pack * feat, itemsize, 6)
        kern = functools.partial(_ln_packed_kernel, eps=eps, feat=feat)
        out = _ln_call(kern, xp, ap, bp, tile_rows, vmem_limit)
        return out.reshape(orig_shape)

    # TODO(synk): when F is small but rows % (128//F) != 0 (or F does not divide 128) we
    # fall back to the lane-sparse row-wise path; a split call could still pack the bulk.
    tile_rows, vmem_limit = _choose_tile_rows(rows, feat, itemsize, 3)
    kern = functools.partial(_ln_rowwise_kernel, eps=eps, feat=feat)
    out = _ln_call(kern, x2, a2, b2, tile_rows, vmem_limit)
    return out.reshape(orig_shape)


if __name__ == "__main__":
    key = jax.random.PRNGKey(0)
    eps = 1e-6

    def ref_layernorm(x, a, b):
        mean = jnp.mean(x, axis=-1, keepdims=True)
        std = jnp.std(x, axis=-1, keepdims=True, ddof=1)   # torch.std default: unbiased
        return a * (x - mean) / (std + eps) + b

    k1, k2, k3 = jax.random.split(key, 3)

    # Case 1: F=32 (divides 128), rows = 2*8 = 16 divisible by pack=4 -> lane-dense packed path.
    f1 = 32
    a1 = jnp.ones((f1,), dtype=jnp.float32)    # nn.Parameter(torch.ones(features))
    b1 = jnp.zeros((f1,), dtype=jnp.float32)   # nn.Parameter(torch.zeros(features))
    x1 = jax.random.normal(k1, (2, 8, f1), dtype=jnp.float32)
    y1 = jax.block_until_ready(layer_norm(x1, a1, b1, eps=eps))
    assert jnp.allclose(y1, ref_layernorm(x1, a1, b1), atol=1e-5, rtol=1e-5), "mismatch (packed)"

    # Case 2: ragged rows (3*5 = 15, not divisible by 4) -> row-wise fallback + masked tail block.
    x2 = jax.random.normal(k2, (3, 5, f1), dtype=jnp.float32)
    y2 = jax.block_until_ready(layer_norm(x2, a1, b1, eps=eps))
    assert jnp.allclose(y2, ref_layernorm(x2, a1, b1), atol=1e-5, rtol=1e-5), "mismatch (ragged)"

    # Case 3: F=256 (multiple of 128) -> row-wise lane-dense path.
    f3 = 256
    a3 = jnp.ones((f3,), dtype=jnp.float32)
    b3 = jnp.zeros((f3,), dtype=jnp.float32)
    x3 = jax.random.normal(k3, (2, 8, f3), dtype=jnp.float32)
    y3 = jax.block_until_ready(layer_norm(x3, a3, b3, eps=eps))
    assert jnp.allclose(y3, ref_layernorm(x3, a3, b3), atol=1e-5, rtol=1e-5), "mismatch (F=256)"

    print("KERNEL_OK")
</pallas_src>

<mosaic_0001>
module attributes {stable_mosaic.version = 11 : i64} {
  func.func @_ln_packed_kernel(%arg0: i32, %arg1: memref<8x128xf32, #tpu.memory_space<vmem>>, %arg2: memref<1x128xf32, #tpu.memory_space<vmem>>, %arg3: memref<1x128xf32, #tpu.memory_space<vmem>>, %arg4: memref<8x128xf32, #tpu.memory_space<vmem>>) attributes {dimension_semantics = [#tpu.dimension_semantics<parallel>], iteration_bounds = array<i64: 1>, scalar_prefetch = 0 : i64, scratch_operands = 0 : i64, tpu.core_type = #tpu.core_type<tc>, window_params = [{transform_indices = @transform_0, window_bounds = array<i64: 8, 128>}, {pipeline_mode = #tpu.pipeline_mode<synchronous>, transform_indices = @transform_1, window_bounds = array<i64: 1, 128>}, {pipeline_mode = #tpu.pipeline_mode<synchronous>, transform_indices = @transform_2, window_bounds = array<i64: 1, 128>}, {transform_indices = @transform_3, window_bounds = array<i64: 8, 128>}]} {
    %c0 = arith.constant 0 : index
    %c0_0 = arith.constant 0 : index
    %0 = vector.load %arg1[%c0, %c0_0] : memref<8x128xf32, #tpu.memory_space<vmem>>, vector<8x128xf32>
    %1 = tpu.iota {dimensions = array<i32: 0>} : vector<128x128xi32>
    %c96_i32 = arith.constant 96 : i32
    %2 = vector.broadcast %c96_i32 : i32 to vector<128x128xi32>
    %3 = arith.andi %1, %2 : vector<128x128xi32>
    %4 = tpu.iota {dimensions = array<i32: 1>} : vector<128x128xi32>
    %c96_i32_1 = arith.constant 96 : i32
    %5 = vector.broadcast %c96_i32_1 : i32 to vector<128x128xi32>
    %6 = arith.andi %4, %5 : vector<128x128xi32>
    %7 = arith.cmpi eq, %3, %6 : vector<128x128xi32>
    %8 = arith.extui %7 : vector<128x128xi1> to vector<128x128xi32>
    %9 = arith.sitofp %8 : vector<128x128xi32> to vector<128x128xf32>
    %cst = arith.constant dense<0.000000e+00> : vector<8x128xf32>
    %10 = tpu.matmul %0, %9, %cst {dimension_numbers = #tpu.dot_dimension_numbers<[1], [0], [0], [1], [0, 0, 1, 1], [], []>} : vector<8x128xf32>, vector<128x128xf32>, vector<8x128xf32> -> vector<8x128xf32>
    %11 = arith.mulf %0, %0 : vector<8x128xf32>
    %cst_2 = arith.constant dense<0.000000e+00> : vector<8x128xf32>
    %12 = tpu.matmul %11, %9, %cst_2 {dimension_numbers = #tpu.dot_dimension_numbers<[1], [0], [0], [1], [0, 0, 1, 1], [], []>} : vector<8x128xf32>, vector<128x128xf32>, vector<8x128xf32> -> vector<8x128xf32>
    %cst_3 = arith.constant 3.125000e-02 : f32
    %13 = vector.broadcast %cst_3 : f32 to vector<8x128xf32>
    %14 = arith.mulf %10, %13 : vector<8x128xf32>
    %15 = arith.mulf %10, %14 : vector<8x128xf32>
    %16 = arith.subf %12, %15 : vector<8x128xf32>
    %cst_4 = arith.constant 0.0322580636 : f32
    %17 = vector.broadcast %cst_4 : f32 to vector<8x128xf32>
    %18 = arith.mulf %16, %17 : vector<8x128xf32>
    %cst_5 = arith.constant 0.000000e+00 : f32
    %19 = vector.broadcast %cst_5 : f32 to vector<8x128xf32>
    %20 = arith.maximumf %18, %19 : vector<8x128xf32>
    %21 = math.sqrt %20 : vector<8x128xf32>
    %cst_6 = arith.constant 9.99999997E-7 : f32
    %22 = vector.broadcast %cst_6 : f32 to vector<8x128xf32>
    %23 = arith.addf %21, %22 : vector<8x128xf32>
    %24 = tpu.reciprocal %23 : vector<8x128xf32> -> vector<8x128xf32>
    %c0_7 = arith.constant 0 : index
    %c0_8 = arith.constant 0 : index
    %25 = vector.load %arg2[%c0_7, %c0_8] : memref<1x128xf32, #tpu.memory_space<vmem>>, vector<1x128xf32>
    %c0_9 = arith.constant 0 : index
    %c0_10 = arith.constant 0 : index
    %26 = vector.load %arg3[%c0_9, %c0_10] : memref<1x128xf32, #tpu.memory_space<vmem>>, vector<1x128xf32>
    %27 = arith.subf %0, %14 : vector<8x128xf32>
    %28 = arith.mulf %27, %24 : vector<8x128xf32>
    %29 = vector.broadcast %25 : vector<1x128xf32> to vector<8x128xf32>
    %30 = arith.mulf %28, %29 : vector<8x128xf32>
    %31 = vector.broadcast %26 : vector<1x128xf32> to vector<8x128xf32>
    %32 = arith.addf %30, %31 : vector<8x128xf32>
    %c0_11 = arith.constant 0 : index
    %c0_12 = arith.constant 0 : index
    %33 = vector.load %arg4[%c0_11, %c0_12] : memref<8x128xf32, #tpu.memory_space<vmem>>, vector<8x128xf32>
    tpu.vector_store %arg4[%c0_11, %c0_12], %32 {strides = array<i32>} : memref<8x128xf32, #tpu.memory_space<vmem>>, vector<8x128xf32>,
    return
  }
  func.func @transform_0(%arg0: i32) -> (i32, i32) {
    %c0_i32 = arith.constant 0 : i32
    %c0_i32_0 = arith.constant 0 : i32
    return %arg0, %c0_i32 : i32, i32
  }
  func.func @transform_1(%arg0: i32) -> (i32, i32) {
    %c0_i32 = arith.constant 0 : i32
    %c0_i32_0 = arith.constant 0 : i32
    %c0_i32_1 = arith.constant 0 : i32
    return %c0_i32, %c0_i32_0 : i32, i32
  }
  func.func @transform_2(%arg0: i32) -> (i32, i32) {
    %c0_i32 = arith.constant 0 : i32
    %c0_i32_0 = arith.constant 0 : i32
    %c0_i32_1 = arith.constant 0 : i32
    return %c0_i32, %c0_i32_0 : i32, i32
  }
  func.func @transform_3(%arg0: i32) -> (i32, i32) {
    %c0_i32 = arith.constant 0 : i32
    %c0_i32_0 = arith.constant 0 : i32
    return %arg0, %c0_i32 : i32, i32
  }
}

</mosaic_0001>

<llo_original>
// kernel: tpu_custom_call.1
$region0: #{tpu_custom_call.1}
  #allocation0 [shape = 'u32[]', space=smem, size = 0x4, offset = 0x4, fixed_abs, tag = 'smem constant byte address 0x4 - core index']
  #allocation1 [shape = 'u32[144,128]{1,0:T(1,128)}', space=vmem, size = 0x12000, scoped, tag = 'internal scratch']
  %s0 = inlined_call_operand.hbm [shape: f32[4,128], index: 0, kind: input, shape index: {}]
  %s1 = inlined_call_operand.vmem [shape: f32[1,128], index: 1, kind: input, shape index: {}]
  %s2 = inlined_call_operand.vmem [shape: f32[1,128], index: 2, kind: input, shape index: {}]
  %s3 = inlined_call_operand.hbm [shape: f32[4,128], index: 3, kind: output, shape index: {}]
  %s4 = sld [smem:[#allocation0]]
  $region26: #{tpu_custom_call.1} parent=0
    _
  %s6 = ssub.s32 1, %s4
  %s7 = scalar_select 0, %s6, %s4
  $region1: #{tpu_custom_call.1} parent=0
    #allocation2 [shape = 'u8[4096]{0}', space=vmem, size = 0x1000, scoped, tag = 'input window, operand 0, single buffered']
    #allocation3 [shape = 's32[1]{0}', space=sflag, size = 0x4, scoped, tag = 'scoped memory for tpu_custom_call.1']
    #allocation4 [shape = 's32[1]{0}', space=sflag, size = 0x4, scoped, tag = 'scoped memory for tpu_custom_call.1']
    #allocation5 [shape = 'u8[4096]{0}', space=vmem, size = 0x1000, scoped, tag = 'output window, operand 0, single buffered']
    %8 = vsyncpa [#allocation3], 0
    %9 = vsyncpa [#allocation4], 0
    // Predicated region
    $region2: #{tpu_custom_call.1} parent=1 // pred_check
      _
    $region3: #{tpu_custom_call.1} parent=1 // pred_check_branch
      %11 = sbr.rel (0) target = $region5
    $region4: #{tpu_custom_call.1} parent=1 // pred_region
      %s13 = ssub.s32 128, 64
      %14 = vsyncadd [#allocation3], %s13
      %s15 = sshll.u32 [#allocation2], 4
      %s16 = int_to_ptr.vmem [resolvable:$true] %s15
      %21 = dma.hbm_to_vmem [thread:$0]  %s0, 64, %s16, [#allocation3], 64, 64, 4
    $region5: #{tpu_custom_call.1} parent=1 // pred_fallthru
      _
    // Predicated region
    $region6: #{tpu_custom_call.1} parent=1 // pred_check
      _
    $region7: #{tpu_custom_call.1} parent=1 // pred_check_branch
      %23 = sbr.rel (0) target = $region9
    $region8: #{tpu_custom_call.1} parent=1 // pred_region
      _
    $region9: #{tpu_custom_call.1} parent=1 // pred_fallthru
      _
    // Predicated region
    $region10: #{tpu_custom_call.1} parent=1 // pred_check
      _
    $region11: #{tpu_custom_call.1} parent=1 // pred_check_branch
      %25 = sbr.rel (0) target = $region13
    $region12: #{tpu_custom_call.1} parent=1 // pred_region
      _
    $region13: #{tpu_custom_call.1} parent=1 // pred_fallthru
      _
    // Predicated region
    $region14: #{tpu_custom_call.1} parent=1 // pred_check
      _
    $region15: #{tpu_custom_call.1} parent=1 // pred_check_branch
      %27 = sbr.rel (0) target = $region17
    $region16: #{tpu_custom_call.1} parent=1 // pred_region
      %28 = dma.done [#allocation3], 128
    $region17: #{tpu_custom_call.1} parent=1 // pred_fallthru
      _
    %v29 = vld [vmem:[#allocation2] sm:$0xff]
    %v30 = vlaneseq
    %v31 = vshrl.u32 %v30, 7
    %v32 = vadd.s32 %v31, 8
    %v33 = vadd.s32 %v31, 16
    %v34 = vadd.s32 %v31, 24
    %v35 = vadd.s32 %v31, 32
    %v36 = vadd.s32 %v31, 40
    %v37 = vadd.s32 %v31, 48
    %v38 = vadd.s32 %v31, 56
    %v39 = vadd.s32 %v31, 64
    %v40 = vadd.s32 %v31, 72
    %v41 = vadd.s32 %v31, 80
    %v42 = vadd.s32 %v31, 88
    %v43 = vadd.s32 %v31, 96
    %v44 = vadd.s32 %v31, 104
    %v45 = vadd.s32 %v31, 112
    %v46 = vadd.s32 %v31, 120
    %v47 = vand.u32 %v31, 96
    %v48 = vand.u32 %v32, 96
    %v49 = vand.u32 %v33, 96
    %v50 = vand.u32 %v34, 96
    %v51 = vand.u32 %v35, 96
    %v52 = vand.u32 %v36, 96
    %v53 = vand.u32 %v37, 96
    %v54 = vand.u32 %v38, 96
    %v55 = vand.u32 %v39, 96
    %v56 = vand.u32 %v40, 96
    %v57 = vand.u32 %v41, 96
    %v58 = vand.u32 %v42, 96
    %v59 = vand.u32 %v43, 96
    %v60 = vand.u32 %v44, 96
    %v61 = vand.u32 %v45, 96
    %v62 = vand.u32 %v46, 96
    %v63 = vlaneseq
    %v64 = vand.u32 %v63, 127
    %v65 = vand.u32 %v64, 96
    %vm66 = vcmp.eq.s32.totalorder %v47, %v65
    %vm67 = vcmp.eq.s32.totalorder %v48, %v65
    %vm68 = vcmp.eq.s32.totalorder %v49, %v65
    %vm69 = vcmp.eq.s32.totalorder %v50, %v65
    %vm70 = vcmp.eq.s32.totalorder %v51, %v65
    %vm71 = vcmp.eq.s32.totalorder %v52, %v65
    %vm72 = vcmp.eq.s32.totalorder %v53, %v65
    %vm73 = vcmp.eq.s32.totalorder %v54, %v65
    %vm74 = vcmp.eq.s32.totalorder %v55, %v65
    %vm75 = vcmp.eq.s32.totalorder %v56, %v65
    %vm76 = vcmp.eq.s32.totalorder %v57, %v65
    %vm77 = vcmp.eq.s32.totalorder %v58, %v65
    %vm78 = vcmp.eq.s32.totalorder %v59, %v65
    %vm79 = vcmp.eq.s32.totalorder %v60, %v65
    %vm80 = vcmp.eq.s32.totalorder %v61, %v65
    %vm81 = vcmp.eq.s32.totalorder %v62, %v65
    %v82 = vsel %vm66, 1, 0
    %v83 = vsel %vm67, 1, 0
    %v84 = vsel %vm68, 1, 0
    %v85 = vsel %vm69, 1, 0
    %v86 = vsel %vm70, 1, 0
    %v87 = vsel %vm71, 1, 0
    %v88 = vsel %vm72, 1, 0
    %v89 = vsel %vm73, 1, 0
    %v90 = vsel %vm74, 1, 0
    %v91 = vsel %vm75, 1, 0
    %v92 = vsel %vm76, 1, 0
    %v93 = vsel %vm77, 1, 0
    %v94 = vsel %vm78, 1, 0
    %v95 = vsel %vm79, 1, 0
    %v96 = vsel %vm80, 1, 0
    %v97 = vsel %vm81, 1, 0
    %v98 = vcvt.s32.f32 %v82
    %v99 = vcvt.s32.f32 %v83
    %v100 = vcvt.s32.f32 %v84
    %v101 = vcvt.s32.f32 %v85
    %v102 = vcvt.s32.f32 %v86
    %v103 = vcvt.s32.f32 %v87
    %v104 = vcvt.s32.f32 %v88
    %v105 = vcvt.s32.f32 %v89
    %v106 = vcvt.s32.f32 %v90
    %v107 = vcvt.s32.f32 %v91
    %v108 = vcvt.s32.f32 %v92
    %v109 = vcvt.s32.f32 %v93
    %v110 = vcvt.s32.f32 %v94
    %v111 = vcvt.s32.f32 %v95
    %v112 = vcvt.s32.f32 %v96
    %v113 = vcvt.s32.f32 %v97
    %114 = vmatprep.subr.mxu0 0.0
    %115 = vmatpush1.msra.mxu0 %v113
    %116 = vmatprep.subr.mxu0 0.0
    %117 = vmatpush1.msra.mxu0 %v112
    %118 = vmatprep.subr.mxu0 0.0
    %119 = vmatpush1.msra.mxu0 %v111
    %120 = vmatprep.subr.mxu0 0.0
    %121 = vmatpush1.msra.mxu0 %v110
    %122 = vmatprep.subr.mxu0 0.0
    %123 = vmatpush1.msra.mxu0 %v109
    %124 = vmatprep.subr.mxu0 0.0
    %125 = vmatpush1.msra.mxu0 %v108
    %126 = vmatprep.subr.mxu0 0.0
    %127 = vmatpush1.msra.mxu0 %v107
    %128 = vmatprep.subr.mxu0 0.0
    %129 = vmatpush1.msra.mxu0 %v106
    %130 = vmatprep.subr.mxu0 0.0
    %131 = vmatpush1.msra.mxu0 %v105
    %132 = vmatprep.subr.mxu0 0.0
    %133 = vmatpush1.msra.mxu0 %v104
    %134 = vmatprep.subr.mxu0 0.0
    %135 = vmatpush1.msra.mxu0 %v103
    %136 = vmatprep.subr.mxu0 0.0
    %137 = vmatpush1.msra.mxu0 %v102
    %138 = vmatprep.subr.mxu0 0.0
    %139 = vmatpush1.msra.mxu0 %v101
    %140 = vmatprep.subr.mxu0 0.0
    %141 = vmatpush1.msra.mxu0 %v100
    %142 = vmatprep.subr.mxu0 0.0
    %143 = vmatpush1.msra.mxu0 %v99
    %144 = vmatprep.subr.mxu0 0.0
    %145 = vmatpush1.msra.mxu0 %v98
    %146 = vmatprep.subr.mxu0 0.0
    %147 = vmatpush2.msra.mxu0 0.0
    %148 = vmatprep.subr.mxu0 0.0
    %149 = vmatpush2.msra.mxu0 0.0
    %150 = vmatprep.subr.mxu0 0.0
    %151 = vmatpush2.msra.mxu0 0.0
    %152 = vmatprep.subr.mxu0 0.0
    %153 = vmatpush2.msra.mxu0 0.0
    %154 = vmatprep.subr.mxu0 0.0
    %155 = vmatpush2.msra.mxu0 0.0
    %156 = vmatprep.subr.mxu0 0.0
    %157 = vmatpush2.msra.mxu0 0.0
    %158 = vmatprep.subr.mxu0 0.0
    %159 = vmatpush2.msra.mxu0 0.0
    %160 = vmatprep.subr.mxu0 0.0
    %161 = vmatpush2.msra.mxu0 0.0
    %162 = vmatprep.subr.mxu0 0.0
    %163 = vmatpush2.msra.mxu0 0.0
    %164 = vmatprep.subr.mxu0 0.0
    %165 = vmatpush2.msra.mxu0 0.0
    %166 = vmatprep.subr.mxu0 0.0
    %167 = vmatpush2.msra.mxu0 0.0
    %168 = vmatprep.subr.mxu0 0.0
    %169 = vmatpush2.msra.mxu0 0.0
    %170 = vmatprep.subr.mxu0 0.0
    %171 = vmatpush2.msra.mxu0 0.0
    %172 = vmatprep.subr.mxu0 0.0
    %173 = vmatpush2.msra.mxu0 0.0
    %174 = vmatprep.subr.mxu0 0.0
    %175 = vmatpush2.msra.mxu0 0.0
    %176 = vmatprep.subr.mxu0 0.0
    %177 = vmatpush2.msra.mxu0 0.0
    %178 = vmatprep.mubr.f32.mxu0 0.0
    %179 = vmatmul.mubr.f32.gmra.mxu0 %v29
    %v180 = vpop.f32.mrf.mxu0
    %v181 = vadd.f32 0.0, %v180
    %v182 = vpop.f32.mrf.mxu0
    %183 = vdwg.mxu0
    %v184 = vmul.f32 %v29, %v29
    %185 = vmatprep.subr.mxu0 0.0
    %186 = vmatpush1.msra.mxu0 %v113
    %187 = vmatprep.subr.mxu0 0.0
    %188 = vmatpush1.msra.mxu0 %v112
    %189 = vmatprep.subr.mxu0 0.0
    %190 = vmatpush1.msra.mxu0 %v111
    %191 = vmatprep.subr.mxu0 0.0
    %192 = vmatpush1.msra.mxu0 %v110
    %193 = vmatprep.subr.mxu0 0.0
    %194 = vmatpush1.msra.mxu0 %v109
    %195 = vmatprep.subr.mxu0 0.0
    %196 = vmatpush1.msra.mxu0 %v108
    %197 = vmatprep.subr.mxu0 0.0
    %198 = vmatpush1.msra.mxu0 %v107
    %199 = vmatprep.subr.mxu0 0.0
    %200 = vmatpush1.msra.mxu0 %v106
    %201 = vmatprep.subr.mxu0 0.0
    %202 = vmatpush1.msra.mxu0 %v105
    %203 = vmatprep.subr.mxu0 0.0
    %204 = vmatpush1.msra.mxu0 %v104
    %205 = vmatprep.subr.mxu0 0.0
    %206 = vmatpush1.msra.mxu0 %v103
    %207 = vmatprep.subr.mxu0 0.0
    %208 = vmatpush1.msra.mxu0 %v102
    %209 = vmatprep.subr.mxu0 0.0
    %210 = vmatpush1.msra.mxu0 %v101
    %211 = vmatprep.subr.mxu0 0.0
    %212 = vmatpush1.msra.mxu0 %v100
    %213 = vmatprep.subr.mxu0 0.0
    %214 = vmatpush1.msra.mxu0 %v99
    %215 = vmatprep.subr.mxu0 0.0
    %216 = vmatpush1.msra.mxu0 %v98
    %217 = vmatprep.subr.mxu0 0.0
    %218 = vmatpush2.msra.mxu0 0.0
    %219 = vmatprep.subr.mxu0 0.0
    %220 = vmatpush2.msra.mxu0 0.0
    %221 = vmatprep.subr.mxu0 0.0
    %222 = vmatpush2.msra.mxu0 0.0
    %223 = vmatprep.subr.mxu0 0.0
    %224 = vmatpush2.msra.mxu0 0.0
    %225 = vmatprep.subr.mxu0 0.0
    %226 = vmatpush2.msra.mxu0 0.0
    %227 = vmatprep.subr.mxu0 0.0
    %228 = vmatpush2.msra.mxu0 0.0
    %229 = vmatprep.subr.mxu0 0.0
    %230 = vmatpush2.msra.mxu0 0.0
    %231 = vmatprep.subr.mxu0 0.0
    %232 = vmatpush2.msra.mxu0 0.0
    %233 = vmatprep.subr.mxu0 0.0
    %234 = vmatpush2.msra.mxu0 0.0
    %235 = vmatprep.subr.mxu0 0.0
    %236 = vmatpush2.msra.mxu0 0.0
    %237 = vmatprep.subr.mxu0 0.0
    %238 = vmatpush2.msra.mxu0 0.0
    %239 = vmatprep.subr.mxu0 0.0
    %240 = vmatpush2.msra.mxu0 0.0
    %241 = vmatprep.subr.mxu0 0.0
    %242 = vmatpush2.msra.mxu0 0.0
    %243 = vmatprep.subr.mxu0 0.0
    %244 = vmatpush2.msra.mxu0 0.0
    %245 = vmatprep.subr.mxu0 0.0
    %246 = vmatpush2.msra.mxu0 0.0
    %247 = vmatprep.subr.mxu0 0.0
    %248 = vmatpush2.msra.mxu0 0.0
    %249 = vmatprep.mubr.f32.mxu0 0.0
    %250 = vmatmul.mubr.f32.gmra.mxu0 %v184
    %v251 = vpop.f32.mrf.mxu0
    %v252 = vadd.f32 0.0, %v251
    %v253 = vpop.f32.mrf.mxu0
    %254 = vdwg.mxu0
    %v255 = vmul.f32 %v181, 0.03125
    %v256 = vmul.f32 %v181, %v255
    %v257 = vsub.f32 %v252, %v256
    %v258 = vmul.f32 %v257, 0.032258064
    %v259 = vmax.f32 %v258, 0.0
    %v260 = vrsqrt.pop %v259
    %v261 = vmul.f32 %v259, %v260
    %vm262 = vcmp.eq.f32.partialorder %v259, inf
    %v263 = vsel %vm262, %v259, %v261
    %vm264 = vcmp.eq.f32.partialorder %v259, 0.0
    %v265 = vand.u32 %v259, 2147483648
    %v266 = vsel %vm264, %v265, %v263
    %v267 = vadd.f32 %v266, 1e-06
    %v268 = vrcp.pop %v267
    %v269 = vld [vmem:[%s1] sm:$0x1]
    %v270 = vld [vmem:[%s2] sm:$0x1]
    %v271 = vsub.f32 %v29, %v255
    %v272 = vmul.f32 %v271, %v268
    %v274 = vlaneseq
    %v275 = vshrl.u32 %v274, 7
    %v276 = vsub.s32 0, %v275
    %v277 = vrot.slane %v269, %v276
    %v279 = vmul.f32 %v272, %v277
    %v281 = vlaneseq
    %v282 = vshrl.u32 %v281, 7
    %v283 = vsub.s32 0, %v282
    %v284 = vrot.slane %v270, %v283
    %v286 = vadd.f32 %v279, %v284
    %287 = vst [vmem:[#allocation5] sm:$0xff] %v286
    // Predicated region
    $region18: #{tpu_custom_call.1} parent=1 // pred_check
      _
    $region19: #{tpu_custom_call.1} parent=1 // pred_check_branch
      %289 = sbr.rel (0) target = $region21
    $region20: #{tpu_custom_call.1} parent=1 // pred_region
      %s291 = ssub.s32 128, 64
      %292 = vsyncadd [#allocation4], %s291
      %s293 = sshll.u32 [#allocation5], 4
      %s294 = int_to_ptr.vmem [resolvable:$true] %s293
      %299 = dma.vmem_to_hbm [thread:$0]  %s294, 64, %s3, [#allocation4], 64, 64, 4
    $region21: #{tpu_custom_call.1} parent=1 // pred_fallthru
      _
    // Predicated region
    $region22: #{tpu_custom_call.1} parent=1 // pred_check
      _
    $region23: #{tpu_custom_call.1} parent=1 // pred_check_branch
      %301 = sbr.rel (0) target = $region25
    $region24: #{tpu_custom_call.1} parent=1 // pred_region
      %302 = dma.done [#allocation4], 128
    $region25: #{tpu_custom_call.1} parent=1 // pred_fallthru
      _
    %303 = vsyncpa [#allocation3], 1
    %304 = vsyncpa [#allocation4], 1

</llo_original>
